<compile_context>
chip_gen: v7x
topology: tpu7x:2x2x1
jax: 0.10.0
libtpu: 0.0.40
codegen_flags: <defaults>
</compile_context>

<pallas_src>
import functools

import jax
import jax.numpy as jnp
import numpy as np
from jax import lax
from jax.experimental import pallas as pl
from jax.experimental.pallas import tpu as pltpu

SIGMA = 0.05
LAM1 = 1.0 / SIGMA   # module-level lam1 in the reference script
LAM2 = 1.0 / SIGMA   # module-level lam2 in the reference script


def _pinn_kernel(x_ref, p_ref, o_ref, stk_ref,
                 *, n_valid, npad, h1_dim, h2_dim, lam1, lam2):
    H1, H2 = h1_dim, h2_dim

    x = x_ref[...]                               # (1, Npad)   samples along lanes

    # ---- static slices of the packed parameter slab (one DMA for all params) ----
    w2t = p_ref[0:H2, 0:H1]                      # (H2, H1)  = W2^T
    w1 = p_ref[0:H1, H1 + 0:H1 + 1]              # (H1, 1)   = W1^T
    b1 = p_ref[0:H1, H1 + 1:H1 + 2]              # (H1, 1)
    b2 = p_ref[0:H2, H1 + 2:H1 + 3]              # (H2, 1)
    w3c = p_ref[0:H2, H1 + 3:H1 + 4]             # (H2, 1)   = W3 column
    b3 = p_ref[0:1, H1 + 4:H1 + 5]               # (1, 1)

    # ---- layer 1 (K=1): pure VPU broadcast fmadd, no MXU ----
    z1 = w1 * x + b1                             # (H1, Npad)
    h1 = jnp.tanh(z1)
    s1 = 1.0 - h1 * h1                           # tanh'(z1)
    dh1 = s1 * w1                                # dh1/dx   (dz1/dx = W1, row-constant)
    d2h1 = dh1 * (h1 * (-2.0 * w1))              # = -2*h1*s1*w1^2, reuses dh1

    # ---- stage [h1 | dh1 | d2h1] into lane-aligned scratch (explicit aligned stores) ----
    stk_ref[:, 0 * npad:1 * npad] = h1
    stk_ref[:, 1 * npad:2 * npad] = dh1
    stk_ref[:, 2 * npad:3 * npad] = d2h1

    # ---- layer 2: one fused MXU matmul for (value, d/dx, d2/dx2) ----
    zz = jnp.dot(w2t, stk_ref[...], preferred_element_type=jnp.float32)   # (H2, 3*Npad)
    z2 = zz[:, 0 * npad:1 * npad] + b2
    dz2 = zz[:, 1 * npad:2 * npad]
    d2z2 = zz[:, 2 * npad:3 * npad]
    h2 = jnp.tanh(z2)
    s2 = 1.0 - h2 * h2
    d2h2 = s2 * (d2z2 - 2.0 * h2 * dz2 * dz2)                             # d2h2/dx2

    # ---- output layer: unscaled select, VPU scale + sublane reduce, scale AFTER ----
    col = lax.broadcasted_iota(jnp.int32, (1, npad), 1)
    is_bd = jnp.logical_and(col >= n_valid - 2, col < n_valid)            # last two real rows
    sel = jnp.where(is_bd, h2, d2h2)                                      # (H2, Npad), unscaled
    out = jnp.sum(w3c * sel, axis=0, keepdims=True)                       # (1, Npad)  w3 . sel
    scale = jnp.where(is_bd, lam2, 0.01 * lam1)                           # column-constant factor
    # b3 only contributes to u (boundary branch); d2(b3)/dx2 = 0.
    o_ref[...] = out * scale + jnp.where(is_bd, lam2 * b3, 0.0)


def pack_params(params):
    """Pack (w1,b1,w2,b2,w3,b3) into one pre-transposed f32 slab.  Call ONCE per
    parameter update, outside the forward; the kernel slices it statically."""
    w1, b1, w2, b2, w3, b3 = params
    H1 = w1.shape[1]
    H2 = w2.shape[1]
    Hmax = max(H1, H2)
    P = H1 + 8                                   # [W2^T | w1 | b1 | b2 | w3 | b3 | pad]
    slab = jnp.zeros((Hmax, P), jnp.float32)
    slab = slab.at[:H2, :H1].set(w2.astype(jnp.float32).T)
    slab = slab.at[:H1, H1 + 0].set(w1[0].astype(jnp.float32))
    slab = slab.at[:H1, H1 + 1].set(b1[0].astype(jnp.float32))
    slab = slab.at[:H2, H1 + 2].set(b2[0].astype(jnp.float32))
    slab = slab.at[:H2, H1 + 3].set(w3[:, 0].astype(jnp.float32))
    slab = slab.at[0, H1 + 4].set(b3[0, 0].astype(jnp.float32))
    return slab, (H1, H2)


def pinn2possion_forward(X, packed, lam1=LAM1, lam2=LAM2):
    """X: (N, 1) f32.  packed = pack_params(params).  Returns (N, 1) f32."""
    slab, (H1, H2) = packed
    N = X.shape[0]
    Npad = ((N + 127) // 128) * 128
    # NOTE: 130 real samples -> Npad=256 means ~49% padded lanes; pick N<=128 or
    # near a multiple of 128 at the call site if the collocation count is tunable.

    xt = jnp.pad(X.astype(jnp.float32).reshape(1, N), ((0, 0), (0, Npad - N)))

    kernel = functools.partial(_pinn_kernel, n_valid=N, npad=Npad,
                               h1_dim=H1, h2_dim=H2,
                               lam1=float(lam1), lam2=float(lam2))
    full = lambda shape: pl.BlockSpec(shape, lambda: tuple(0 for _ in shape),
                                      memory_space=pltpu.VMEM)

    flops = 2 * H1 * H2 * 3 * Npad + 24 * max(H1, H2) * Npad
    bytes_accessed = 4 * (Npad + slab.size + Npad)
    transcendentals = (H1 + H2) * Npad

    out = pl.pallas_call(
        kernel,
        out_shape=jax.ShapeDtypeStruct((1, Npad), jnp.float32),
        grid=(),
        in_specs=[full(xt.shape), full(slab.shape)],
        out_specs=full((1, Npad)),
        scratch_shapes=[pltpu.VMEM((H1, 3 * Npad), jnp.float32)],
        cost_estimate=pl.CostEstimate(flops=flops,
                                      transcendentals=transcendentals,
                                      bytes_accessed=bytes_accessed),
    )(xt, slab)
    return out[0, :N][:, None]


def init_params(key, hiddens=(32, 32)):
    h1, h2 = hiddens
    ks = jax.random.split(key, 6)
    w1 = jax.random.normal(ks[0], (1, h1), jnp.float32) * (1.0 / np.sqrt(1.0))
    b1 = jax.random.normal(ks[1], (1, h1), jnp.float32) * 0.1
    w2 = jax.random.normal(ks[2], (h1, h2), jnp.float32) * (1.0 / np.sqrt(h1))
    b2 = jax.random.normal(ks[3], (1, h2), jnp.float32) * 0.1
    w3 = jax.random.normal(ks[4], (h2, 1), jnp.float32) * (1.0 / np.sqrt(h2))
    b3 = jax.random.normal(ks[5], (1, 1), jnp.float32) * 0.1
    return w1, b1, w2, b2, w3, b3


def _reference_forward(X, params, lam1=LAM1, lam2=LAM2):
    """Pure-JAX reference using autodiff (matches torch.autograd.grad semantics)."""
    w1, b1, w2, b2, w3, b3 = params

    def u_scalar(x):                     # scalar -> scalar MLP
        h1 = jnp.tanh(x * w1[0] + b1[0])
        h2 = jnp.tanh(h1 @ w2 + b2[0])
        return (h2 @ w3 + b3[0])[0]

    u_xx = jax.vmap(jax.grad(jax.grad(u_scalar)))(X[:-2, 0])[:, None]
    u_bd = jax.vmap(u_scalar)(X[-2:, 0])[:, None]
    return jnp.concatenate([u_xx * lam1 * 0.01, u_bd * lam2], axis=0)


if __name__ == "__main__":
    key = jax.random.PRNGKey(0)
    k_x, k_p = jax.random.split(key)

    N = 130  # 128 interior collocation points + 2 boundary points
    X = jax.random.uniform(k_x, (N, 1), jnp.float32, minval=-1.0, maxval=1.0)
    params = init_params(k_p, hiddens=(32, 32))

    packed = pack_params(params)         # built once, reused across calls
    out = jax.block_until_ready(pinn2possion_forward(X, packed))
    ref = jax.block_until_ready(_reference_forward(X, params))
    np.testing.assert_allclose(np.asarray(out), np.asarray(ref), rtol=1e-4, atol=2e-5)

    print("KERNEL_OK")
</pallas_src>

<mosaic_0001>
module attributes {stable_mosaic.version = 11 : i64} {
  func.func @_pinn_kernel(%arg0: memref<1x256xf32, #tpu.memory_space<vmem>>, %arg1: memref<32x40xf32, #tpu.memory_space<vmem>>, %arg2: memref<1x256xf32, #tpu.memory_space<vmem>>, %arg3: memref<32x768xf32, #tpu.memory_space<vmem>>) attributes {dimension_semantics = [], scalar_prefetch = 0 : i64, scratch_operands = 1 : i64, tpu.core_type = #tpu.core_type<tc>} {
    %c0 = arith.constant 0 : index
    %c0_0 = arith.constant 0 : index
    %0 = vector.load %arg0[%c0, %c0_0] : memref<1x256xf32, #tpu.memory_space<vmem>>, vector<1x256xf32>
    %c0_1 = arith.constant 0 : index
    %c0_2 = arith.constant 0 : index
    %1 = vector.load %arg1[%c0_1, %c0_2] : memref<32x40xf32, #tpu.memory_space<vmem>>, vector<32x32xf32>
    %c0_3 = arith.constant 0 : index
    %c32 = arith.constant 32 : index
    %2 = vector.load %arg1[%c0_3, %c32] : memref<32x40xf32, #tpu.memory_space<vmem>>, vector<32x1xf32>
    %c0_4 = arith.constant 0 : index
    %c33 = arith.constant 33 : index
    %3 = vector.load %arg1[%c0_4, %c33] : memref<32x40xf32, #tpu.memory_space<vmem>>, vector<32x1xf32>
    %c0_5 = arith.constant 0 : index
    %c34 = arith.constant 34 : index
    %4 = vector.load %arg1[%c0_5, %c34] : memref<32x40xf32, #tpu.memory_space<vmem>>, vector<32x1xf32>
    %c0_6 = arith.constant 0 : index
    %c35 = arith.constant 35 : index
    %5 = vector.load %arg1[%c0_6, %c35] : memref<32x40xf32, #tpu.memory_space<vmem>>, vector<32x1xf32>
    %c0_7 = arith.constant 0 : index
    %c36 = arith.constant 36 : index
    %6 = vector.load %arg1[%c0_7, %c36] : memref<32x40xf32, #tpu.memory_space<vmem>>, vector<1x1xf32>
    %7 = vector.broadcast %2 : vector<32x1xf32> to vector<32x256xf32>
    %8 = vector.broadcast %0 : vector<1x256xf32> to vector<32x256xf32>
    %9 = arith.mulf %7, %8 : vector<32x256xf32>
    %10 = vector.broadcast %3 : vector<32x1xf32> to vector<32x256xf32>
    %11 = arith.addf %9, %10 : vector<32x256xf32>
    %12 = math.tanh %11 : vector<32x256xf32>
    %13 = arith.mulf %12, %12 : vector<32x256xf32>
    %cst = arith.constant 1.000000e+00 : f32
    %14 = vector.broadcast %cst : f32 to vector<32x256xf32>
    %15 = arith.subf %14, %13 : vector<32x256xf32>
    %16 = vector.broadcast %2 : vector<32x1xf32> to vector<32x256xf32>
    %17 = arith.mulf %15, %16 : vector<32x256xf32>
    %cst_8 = arith.constant -2.000000e+00 : f32
    %18 = vector.broadcast %cst_8 : f32 to vector<32x1xf32>
    %19 = arith.mulf %18, %2 : vector<32x1xf32>
    %20 = vector.broadcast %19 : vector<32x1xf32> to vector<32x256xf32>
    %21 = arith.mulf %12, %20 : vector<32x256xf32>
    %22 = arith.mulf %17, %21 : vector<32x256xf32>
    %c0_9 = arith.constant 0 : index
    %c0_10 = arith.constant 0 : index
    %23 = vector.load %arg3[%c0_9, %c0_10] : memref<32x768xf32, #tpu.memory_space<vmem>>, vector<32x256xf32>
    tpu.vector_store %arg3[%c0_9, %c0_10], %12 {strides = array<i32>} : memref<32x768xf32, #tpu.memory_space<vmem>>, vector<32x256xf32>,
    %c0_11 = arith.constant 0 : index
    %c256 = arith.constant 256 : index
    %24 = vector.load %arg3[%c0_11, %c256] : memref<32x768xf32, #tpu.memory_space<vmem>>, vector<32x256xf32>
    tpu.vector_store %arg3[%c0_11, %c256], %17 {strides = array<i32>} : memref<32x768xf32, #tpu.memory_space<vmem>>, vector<32x256xf32>,
    %c0_12 = arith.constant 0 : index
    %c512 = arith.constant 512 : index
    %25 = vector.load %arg3[%c0_12, %c512] : memref<32x768xf32, #tpu.memory_space<vmem>>, vector<32x256xf32>
    tpu.vector_store %arg3[%c0_12, %c512], %22 {strides = array<i32>} : memref<32x768xf32, #tpu.memory_space<vmem>>, vector<32x256xf32>,
    %c0_13 = arith.constant 0 : index
    %c0_14 = arith.constant 0 : index
    %26 = vector.load %arg3[%c0_13, %c0_14] : memref<32x768xf32, #tpu.memory_space<vmem>>, vector<32x768xf32>
    %cst_15 = arith.constant dense<0.000000e+00> : vector<32x768xf32>
    %27 = tpu.matmul %1, %26, %cst_15 {dimension_numbers = #tpu.dot_dimension_numbers<[1], [0], [0], [1], [0, 0, 1, 1], [], []>} : vector<32x32xf32>, vector<32x768xf32>, vector<32x768xf32> -> vector<32x768xf32>
    %28 = vector.extract_strided_slice %27 {offsets = [0, 0], sizes = [32, 256], strides = [1, 1]} : vector<32x768xf32> to vector<32x256xf32>
    %29 = vector.broadcast %4 : vector<32x1xf32> to vector<32x256xf32>
    %30 = arith.addf %28, %29 : vector<32x256xf32>
    %31 = vector.extract_strided_slice %27 {offsets = [0, 256], sizes = [32, 256], strides = [1, 1]} : vector<32x768xf32> to vector<32x256xf32>
    %32 = vector.extract_strided_slice %27 {offsets = [0, 512], sizes = [32, 256], strides = [1, 1]} : vector<32x768xf32> to vector<32x256xf32>
    %33 = math.tanh %30 : vector<32x256xf32>
    %34 = arith.mulf %33, %33 : vector<32x256xf32>
    %cst_16 = arith.constant 1.000000e+00 : f32
    %35 = vector.broadcast %cst_16 : f32 to vector<32x256xf32>
    %36 = arith.subf %35, %34 : vector<32x256xf32>
    %cst_17 = arith.constant 2.000000e+00 : f32
    %37 = vector.broadcast %cst_17 : f32 to vector<32x256xf32>
    %38 = arith.mulf %37, %33 : vector<32x256xf32>
    %39 = arith.mulf %38, %31 : vector<32x256xf32>
    %40 = arith.mulf %39, %31 : vector<32x256xf32>
    %41 = arith.subf %32, %40 : vector<32x256xf32>
    %42 = arith.mulf %36, %41 : vector<32x256xf32>
    %43 = tpu.iota {dimensions = array<i32: 1>} : vector<1x256xi32>
    %c128_i32 = arith.constant 128 : i32
    %44 = vector.broadcast %c128_i32 : i32 to vector<1x256xi32>
    %45 = arith.cmpi sge, %43, %44 : vector<1x256xi32>
    %c130_i32 = arith.constant 130 : i32
    %46 = vector.broadcast %c130_i32 : i32 to vector<1x256xi32>
    %47 = arith.cmpi slt, %43, %46 : vector<1x256xi32>
    %48 = arith.andi %45, %47 : vector<1x256xi1>
    %49 = vector.shape_cast %48 : vector<1x256xi1> to vector<1x256xi1>
    %50 = vector.broadcast %49 : vector<1x256xi1> to vector<32x256xi1>
    %51 = arith.select %50, %33, %42 : vector<32x256xi1>, vector<32x256xf32>
    %52 = vector.broadcast %5 : vector<32x1xf32> to vector<32x256xf32>
    %53 = arith.mulf %52, %51 : vector<32x256xf32>
    %cst_18 = arith.constant dense<0.000000e+00> : vector<256xf32>
    %54 = vector.multi_reduction <add>, %53, %cst_18 [0] : vector<32x256xf32> to vector<256xf32>
    %55 = vector.shape_cast %54 : vector<256xf32> to vector<1x256xf32>
    %cst_19 = arith.constant 2.000000e+01 : f32
    %cst_20 = arith.constant 2.000000e-01 : f32
    %56 = vector.broadcast %cst_19 : f32 to vector<1x256xf32>
    %57 = vector.broadcast %cst_20 : f32 to vector<1x256xf32>
    %58 = arith.select %48, %56, %57 : vector<1x256xi1>, vector<1x256xf32>
    %59 = arith.mulf %55, %58 : vector<1x256xf32>
    %cst_21 = arith.constant 2.000000e+01 : f32
    %60 = vector.broadcast %cst_21 : f32 to vector<1x1xf32>
    %61 = arith.mulf %60, %6 : vector<1x1xf32>
    %cst_22 = arith.constant 0.000000e+00 : f32
    %62 = vector.shape_cast %61 : vector<1x1xf32> to vector<1x1xf32>
    %63 = vector.broadcast %62 : vector<1x1xf32> to vector<1x256xf32>
    %64 = vector.broadcast %cst_22 : f32 to vector<1x256xf32>
    %65 = arith.select %48, %63, %64 : vector<1x256xi1>, vector<1x256xf32>
    %66 = arith.addf %59, %65 : vector<1x256xf32>
    %c0_23 = arith.constant 0 : index
    %c0_24 = arith.constant 0 : index
    %67 = vector.load %arg2[%c0_23, %c0_24] : memref<1x256xf32, #tpu.memory_space<vmem>>, vector<1x256xf32>
    tpu.vector_store %arg2[%c0_23, %c0_24], %66 {strides = array<i32>} : memref<1x256xf32, #tpu.memory_space<vmem>>, vector<1x256xf32>,
    return
  }
}

</mosaic_0001>

<llo_original>
// kernel: tpu_custom_call.1
$region0: #{tpu_custom_call.1}
  #allocation0 [shape = 'u32[]', space=smem, size = 0x4, offset = 0x4, fixed_abs, tag = 'smem constant byte address 0x4 - core index']
  #allocation1 [shape = 'u32[144,128]{1,0:T(1,128)}', space=vmem, size = 0x12000, scoped, tag = 'internal scratch']
  #allocation2 [shape = 'f32[32,768]{1,0:T(8,128)}', space=vmem, size = 0x18000, scoped, tag = 'scratch operand']
  %s0 = inlined_call_operand.hbm [shape: f32[1,256], index: 0, kind: input, shape index: {}]
  %s1 = inlined_call_operand.hbm [shape: f32[32,40], index: 1, kind: input, shape index: {}]
  %s2 = inlined_call_operand.hbm [shape: f32[1,256], index: 2, kind: output, shape index: {}]
  %s3 = sld [smem:[#allocation0]]
  $region26: #{tpu_custom_call.1} parent=0
    _
  %s5 = ssub.s32 1, %s3
  %s6 = scalar_select 0, %s5, %s3
  $region1: #{tpu_custom_call.1} parent=0
    #allocation3 [shape = 'u8[1024]{0}', space=vmem, size = 0x400, scoped, tag = 'input window, operand 0, single buffered']
    #allocation4 [shape = 's32[1]{0}', space=sflag, size = 0x4, scoped, tag = 'scoped memory for tpu_custom_call.1']
    #allocation5 [shape = 's32[1]{0}', space=sflag, size = 0x4, scoped, tag = 'scoped memory for tpu_custom_call.1']
    #allocation6 [shape = 'u8[16384]{0}', space=vmem, size = 0x4000, scoped, tag = 'input window, operand 1, single buffered']
    #allocation7 [shape = 's32[1]{0}', space=sflag, size = 0x4, scoped, tag = 'scoped memory for tpu_custom_call.1']
    #allocation8 [shape = 'u8[1024]{0}', space=vmem, size = 0x400, scoped, tag = 'output window, operand 0, single buffered']
    %7 = vsyncpa [#allocation4], 0
    %8 = vsyncpa [#allocation7], 0
    %9 = vsyncpa [#allocation5], 0
    // Predicated region
    $region2: #{tpu_custom_call.1} parent=1 // pred_check
      _
    $region3: #{tpu_custom_call.1} parent=1 // pred_check_branch
      %11 = sbr.rel (0) target = $region5
    $region4: #{tpu_custom_call.1} parent=1 // pred_region
      %s13 = ssub.s32 32, 32
      %14 = vsyncadd [#allocation4], %s13
      %s16 = sshll.u32 [#allocation3], 4
      %s17 = int_to_ptr.vmem [resolvable:$true] %s16
      %19 = dma.hbm_to_vmem [thread:$0]  %s0, 32, %s17, [#allocation4]
    $region5: #{tpu_custom_call.1} parent=1 // pred_fallthru
      _
    // Predicated region
    $region6: #{tpu_custom_call.1} parent=1 // pred_check
      _
    $region7: #{tpu_custom_call.1} parent=1 // pred_check_branch
      %21 = sbr.rel (0) target = $region9
    $region8: #{tpu_custom_call.1} parent=1 // pred_region
      %s23 = ssub.s32 512, 512
      %24 = vsyncadd [#allocation7], %s23
      %s25 = sshll.u32 [#allocation6], 4
      %s26 = int_to_ptr.vmem [resolvable:$true] %s25
      %31 = dma.hbm_to_vmem [thread:$0]  %s1, 512, %s26, [#allocation7], 128, 128, 8
    $region9: #{tpu_custom_call.1} parent=1 // pred_fallthru
      _
    // Predicated region
    $region10: #{tpu_custom_call.1} parent=1 // pred_check
      _
    $region11: #{tpu_custom_call.1} parent=1 // pred_check_branch
      %33 = sbr.rel (0) target = $region13
    $region12: #{tpu_custom_call.1} parent=1 // pred_region
      %34 = dma.done [#allocation4], 32
    $region13: #{tpu_custom_call.1} parent=1 // pred_fallthru
      _
    // Predicated region
    $region14: #{tpu_custom_call.1} parent=1 // pred_check
      _
    $region15: #{tpu_custom_call.1} parent=1 // pred_check_branch
      %36 = sbr.rel (0) target = $region17
    $region16: #{tpu_custom_call.1} parent=1 // pred_region
      %37 = dma.done [#allocation7], 512
    $region17: #{tpu_custom_call.1} parent=1 // pred_fallthru
      _
    %v38 = vld [vmem:[#allocation3] sm:$0x3]
    %v39 = vld [vmem:[#allocation6] sm:$0xff]
    %v40 = vld [vmem:[#allocation6 + $0x8] sm:$0xff]
    %v41 = vld [vmem:[#allocation6 + $0x10] sm:$0xff]
    %v42 = vld [vmem:[#allocation6 + $0x18] sm:$0xff]
    %v43 = vld [vmem:[#allocation6] sm:$0x1]
    %45 = vset.pattern.permute.xlu0 32
    %46 = vperm.xlu0 %45, %v39
    %v47 = vpop.permute.xlu0 %46
    %50 = vset.pattern.permute.xlu0 32
    %51 = vperm.xlu0 %50, %v40
    %v52 = vpop.permute.xlu0 %51
    %55 = vset.pattern.permute.xlu0 32
    %56 = vperm.xlu0 %55, %v41
    %v57 = vpop.permute.xlu0 %56
    %60 = vset.pattern.permute.xlu0 32
    %61 = vperm.xlu0 %60, %v42
    %v62 = vpop.permute.xlu0 %61
    %v65 = vlaneseq
    %v66 = vshrl.u32 %v65, 7
    %v67 = vsub.s32 0, %v66
    %v68 = vrot.slane %v38, %v67
    %v69 = vlaneseq
    %v70 = vshrl.u32 %v69, 7
    %v71 = vsub.s32 1, %v70
    %v72 = vrot.slane %v38, %v71
    %v75 = vmul.f32 %v47, %v68
    %v76 = vmul.f32 %v47, %v72
    %v77 = vmul.f32 %v52, %v68
    %v78 = vmul.f32 %v52, %v72
    %v79 = vmul.f32 %v57, %v68
    %v80 = vmul.f32 %v57, %v72
    %v81 = vmul.f32 %v62, %v68
    %v82 = vmul.f32 %v62, %v72
    %83 = vset.pattern.permute.xlu0 33
    %84 = vperm.xlu0 %83, %v39
    %v85 = vpop.permute.xlu0 %84
    %87 = vset.pattern.permute.xlu0 33
    %88 = vperm.xlu0 %87, %v40
    %v89 = vpop.permute.xlu0 %88
    %91 = vset.pattern.permute.xlu0 33
    %92 = vperm.xlu0 %91, %v41
    %v93 = vpop.permute.xlu0 %92
    %95 = vset.pattern.permute.xlu0 33
    %96 = vperm.xlu0 %95, %v42
    %v97 = vpop.permute.xlu0 %96
    %v99 = vadd.f32 %v75, %v85
    %v100 = vadd.f32 %v76, %v85
    %v101 = vadd.f32 %v77, %v89
    %v102 = vadd.f32 %v78, %v89
    %v103 = vadd.f32 %v79, %v93
    %v104 = vadd.f32 %v80, %v93
    %v105 = vadd.f32 %v81, %v97
    %v106 = vadd.f32 %v82, %v97
    %v107 = vtanh.pop %v99
    %v108 = vtanh.pop %v100
    %v109 = vtanh.pop %v101
    %v110 = vtanh.pop %v102
    %v111 = vtanh.pop %v103
    %v112 = vtanh.pop %v104
    %v113 = vtanh.pop %v105
    %v114 = vtanh.pop %v106
    %v115 = vmul.f32 %v107, %v107
    %v116 = vmul.f32 %v108, %v108
    %v117 = vmul.f32 %v109, %v109
    %v118 = vmul.f32 %v110, %v110
    %v119 = vmul.f32 %v111, %v111
    %v120 = vmul.f32 %v112, %v112
    %v121 = vmul.f32 %v113, %v113
    %v122 = vmul.f32 %v114, %v114
    %v123 = vsub.f32 1.0, %v115
    %v124 = vsub.f32 1.0, %v116
    %v125 = vsub.f32 1.0, %v117
    %v126 = vsub.f32 1.0, %v118
    %v127 = vsub.f32 1.0, %v119
    %v128 = vsub.f32 1.0, %v120
    %v129 = vsub.f32 1.0, %v121
    %v130 = vsub.f32 1.0, %v122
    %v131 = vmul.f32 %v123, %v47
    %v132 = vmul.f32 %v124, %v47
    %v133 = vmul.f32 %v125, %v52
    %v134 = vmul.f32 %v126, %v52
    %v135 = vmul.f32 %v127, %v57
    %v136 = vmul.f32 %v128, %v57
    %v137 = vmul.f32 %v129, %v62
    %v138 = vmul.f32 %v130, %v62
    %v139 = vmul.f32 %v39, -2.0
    %v140 = vmul.f32 %v40, -2.0
    %v141 = vmul.f32 %v41, -2.0
    %v142 = vmul.f32 %v42, -2.0
    %144 = vset.pattern.permute.xlu0 32
    %145 = vperm.xlu0 %144, %v139
    %v146 = vpop.permute.xlu0 %145
    %149 = vset.pattern.permute.xlu0 32
    %150 = vperm.xlu0 %149, %v140
    %v151 = vpop.permute.xlu0 %150
    %154 = vset.pattern.permute.xlu0 32
    %155 = vperm.xlu0 %154, %v141
    %v156 = vpop.permute.xlu0 %155
    %159 = vset.pattern.permute.xlu0 32
    %160 = vperm.xlu0 %159, %v142
    %v161 = vpop.permute.xlu0 %160
    %v163 = vmul.f32 %v107, %v146
    %v164 = vmul.f32 %v108, %v146
    %v165 = vmul.f32 %v109, %v151
    %v166 = vmul.f32 %v110, %v151
    %v167 = vmul.f32 %v111, %v156
    %v168 = vmul.f32 %v112, %v156
    %v169 = vmul.f32 %v113, %v161
    %v170 = vmul.f32 %v114, %v161
    %v171 = vmul.f32 %v131, %v163
    %v172 = vmul.f32 %v132, %v164
    %v173 = vmul.f32 %v133, %v165
    %v174 = vmul.f32 %v134, %v166
    %v175 = vmul.f32 %v135, %v167
    %v176 = vmul.f32 %v136, %v168
    %v177 = vmul.f32 %v137, %v169
    %v178 = vmul.f32 %v138, %v170
    %179 = vst [vmem:[#allocation2] sm:$0xff] %v107
    %180 = vst [vmem:[#allocation2 + $0x8] sm:$0xff] %v108
    %181 = vst [vmem:[#allocation2 + $0x30] sm:$0xff] %v109
    %182 = vst [vmem:[#allocation2 + $0x38] sm:$0xff] %v110
    %183 = vst [vmem:[#allocation2 + $0x60] sm:$0xff] %v111
    %184 = vst [vmem:[#allocation2 + $0x68] sm:$0xff] %v112
    %185 = vst [vmem:[#allocation2 + $0x90] sm:$0xff] %v113
    %186 = vst [vmem:[#allocation2 + $0x98] sm:$0xff] %v114
    %187 = vst [vmem:[#allocation2 + $0x10] sm:$0xff] %v131
    %188 = vst [vmem:[#allocation2 + $0x18] sm:$0xff] %v132
    %189 = vst [vmem:[#allocation2 + $0x40] sm:$0xff] %v133
    %190 = vst [vmem:[#allocation2 + $0x48] sm:$0xff] %v134
    %191 = vst [vmem:[#allocation2 + $0x70] sm:$0xff] %v135
    %192 = vst [vmem:[#allocation2 + $0x78] sm:$0xff] %v136
    %193 = vst [vmem:[#allocation2 + $0xa0] sm:$0xff] %v137
    %194 = vst [vmem:[#allocation2 + $0xa8] sm:$0xff] %v138
    %195 = vst [vmem:[#allocation2 + $0x20] sm:$0xff] %v171
    %196 = vst [vmem:[#allocation2 + $0x28] sm:$0xff] %v172
    %197 = vst [vmem:[#allocation2 + $0x50] sm:$0xff] %v173
    %198 = vst [vmem:[#allocation2 + $0x58] sm:$0xff] %v174
    %199 = vst [vmem:[#allocation2 + $0x80] sm:$0xff] %v175
    %200 = vst [vmem:[#allocation2 + $0x88] sm:$0xff] %v176
    %201 = vst [vmem:[#allocation2 + $0xb0] sm:$0xff] %v177
    %202 = vst [vmem:[#allocation2 + $0xb8] sm:$0xff] %v178
    %v203 = vld [vmem:[#allocation2] sm:$0xff]
    %v204 = vld [vmem:[#allocation2 + $0x8] sm:$0xff]
    %v205 = vld [vmem:[#allocation2 + $0x10] sm:$0xff]
    %v206 = vld [vmem:[#allocation2 + $0x18] sm:$0xff]
    %v207 = vld [vmem:[#allocation2 + $0x20] sm:$0xff]
    %v208 = vld [vmem:[#allocation2 + $0x28] sm:$0xff]
    %v209 = vld [vmem:[#allocation2 + $0x30] sm:$0xff]
    %v210 = vld [vmem:[#allocation2 + $0x38] sm:$0xff]
    %v211 = vld [vmem:[#allocation2 + $0x40] sm:$0xff]
    %v212 = vld [vmem:[#allocation2 + $0x48] sm:$0xff]
    %v213 = vld [vmem:[#allocation2 + $0x50] sm:$0xff]
    %v214 = vld [vmem:[#allocation2 + $0x58] sm:$0xff]
    %v215 = vld [vmem:[#allocation2 + $0x60] sm:$0xff]
    %v216 = vld [vmem:[#allocation2 + $0x68] sm:$0xff]
    %v217 = vld [vmem:[#allocation2 + $0x70] sm:$0xff]
    %v218 = vld [vmem:[#allocation2 + $0x78] sm:$0xff]
    %v219 = vld [vmem:[#allocation2 + $0x80] sm:$0xff]
    %v220 = vld [vmem:[#allocation2 + $0x88] sm:$0xff]
    %v221 = vld [vmem:[#allocation2 + $0x90] sm:$0xff]
    %v222 = vld [vmem:[#allocation2 + $0x98] sm:$0xff]
    %v223 = vld [vmem:[#allocation2 + $0xa0] sm:$0xff]
    %v224 = vld [vmem:[#allocation2 + $0xa8] sm:$0xff]
    %v225 = vld [vmem:[#allocation2 + $0xb0] sm:$0xff]
    %v226 = vld [vmem:[#allocation2 + $0xb8] sm:$0xff]
    %vm227 = vcmask 261120
    %v228 = vsel %vm227, %v39, 0
    %v230 = vsel %vm227, %v40, 0
    %v232 = vsel %vm227, %v41, 0
    %v234 = vsel %vm227, %v42, 0
    %236 = vmatprep.subr.mxu0 %v204
    %237 = vmatpush1.msra.mxu0 %v203
    %238 = vmatprep.subr.mxu0 %v210
    %239 = vmatpush1.msra.mxu0 %v209
    %240 = vmatprep.subr.mxu0 %v216
    %241 = vmatpush1.msra.mxu0 %v215
    %242 = vmatprep.subr.mxu0 %v222
    %243 = vmatpush1.msra.mxu0 %v221
    %244 = vmatprep.subr.mxu0 0.0
    %245 = vmatpush1.msra.mxu0 0.0
    %246 = vmatprep.subr.mxu0 0.0
    %247 = vmatpush1.msra.mxu0 0.0
    %248 = vmatprep.subr.mxu0 0.0
    %249 = vmatpush1.msra.mxu0 0.0
    %250 = vmatprep.subr.mxu0 0.0
    %251 = vmatpush1.msra.mxu0 0.0
    %252 = vmatprep.subr.mxu0 0.0
    %253 = vmatpush1.msra.mxu0 0.0
    %254 = vmatprep.subr.mxu0 0.0
    %255 = vmatpush1.msra.mxu0 0.0
    %256 = vmatprep.subr.mxu0 0.0
    %257 = vmatpush1.msra.mxu0 0.0
    %258 = vmatprep.subr.mxu0 0.0
    %259 = vmatpush1.msra.mxu0 0.0
    %260 = vmatprep.subr.mxu0 0.0
    %261 = vmatpush1.msra.mxu0 0.0
    %262 = vmatprep.subr.mxu0 0.0
    %263 = vmatpush1.msra.mxu0 0.0
    %264 = vmatprep.subr.mxu0 0.0
    %265 = vmatpush1.msra.mxu0 0.0
    %266 = vmatprep.subr.mxu0 0.0
    %267 = vmatpush1.msra.mxu0 0.0
    %268 = vmatprep.subr.mxu0 0.0
    %269 = vmatpush1.msra.mxu0 0.0
    %270 = vmatprep.subr.mxu0 0.0
    %271 = vmatpush1.msra.mxu0 0.0
    %272 = vmatprep.subr.mxu0 0.0
    %273 = vmatpush1.msra.mxu0 0.0
    %274 = vmatprep.subr.mxu0 0.0
    %275 = vmatpush1.msra.mxu0 0.0
    %276 = vmatprep.subr.mxu0 0.0
    %277 = vmatpush1.msra.mxu0 0.0
    %278 = vmatprep.subr.mxu0 0.0
    %279 = vmatpush1.msra.mxu0 0.0
    %280 = vmatprep.subr.mxu0 0.0
    %281 = vmatpush1.msra.mxu0 0.0
    %282 = vmatprep.subr.mxu0 0.0
    %283 = vmatpush1.msra.mxu0 0.0
    %284 = vmatprep.subr.mxu0 0.0
    %285 = vmatpush1.msra.mxu0 0.0
    %286 = vmatprep.subr.mxu0 0.0
    %287 = vmatpush1.msra.mxu0 0.0
    %288 = vmatprep.subr.mxu0 0.0
    %289 = vmatpush1.msra.mxu0 0.0
    %290 = vmatprep.subr.mxu0 0.0
    %291 = vmatpush1.msra.mxu0 0.0
    %292 = vmatprep.subr.mxu0 0.0
    %293 = vmatpush1.msra.mxu0 0.0
    %294 = vmatprep.subr.mxu0 0.0
    %295 = vmatpush1.msra.mxu0 0.0
    %296 = vmatprep.subr.mxu0 0.0
    %297 = vmatpush1.msra.mxu0 0.0
    %298 = vmatprep.subr.mxu0 0.0
    %299 = vmatpush1.msra.mxu0 0.0
    %300 = vmatprep.mubr.f32.mxu0 0.0
    %301 = vmatmul.mubr.f32.gmra.mrb[0].mxu0 %v228
    %v302 = vpop.f32.mrb[0].mxu0
    %v303 = vadd.f32 0.0, %v302
    %v304 = vpop.f32.mrb[0].mxu0
    %v305 = vadd.f32 0.0, %v304
    %306 = vmatprep.mubr.f32.mxu0 0.0
    %307 = vmatmul.mubr.f32.gmra.mrb[0].mxu0 %v230
    %v308 = vpop.f32.mrb[0].mxu0
    %v309 = vadd.f32 0.0, %v308
    %v310 = vpop.f32.mrb[0].mxu0
    %v311 = vadd.f32 0.0, %v310
    %312 = vmatprep.mubr.f32.mxu0 0.0
    %313 = vmatmul.mubr.f32.gmra.mrb[0].mxu0 %v232
    %v314 = vpop.f32.mrb[0].mxu0
    %v315 = vadd.f32 0.0, %v314
    %v316 = vpop.f32.mrb[0].mxu0
    %v317 = vadd.f32 0.0, %v316
    %318 = vmatprep.mubr.f32.mxu0 0.0
    %319 = vmatmul.mubr.f32.gmra.mrb[0].mxu0 %v234
    %v320 = vpop.f32.mrb[0].mxu0
    %v321 = vadd.f32 0.0, %v320
    %v322 = vpop.f32.mrb[0].mxu0
    %v323 = vadd.f32 0.0, %v322
    %324 = vdwg.mxu0
    %325 = vmatprep.subr.mxu0 %v206
    %326 = vmatpush1.msra.mxu0 %v205
    %327 = vmatprep.subr.mxu0 %v212
    %328 = vmatpush1.msra.mxu0 %v211
    %329 = vmatprep.subr.mxu0 %v218
    %330 = vmatpush1.msra.mxu0 %v217
    %331 = vmatprep.subr.mxu0 %v224
    %332 = vmatpush1.msra.mxu0 %v223
    %333 = vmatprep.subr.mxu0 0.0
    %334 = vmatpush1.msra.mxu0 0.0
    %335 = vmatprep.subr.mxu0 0.0
    %336 = vmatpush1.msra.mxu0 0.0
    %337 = vmatprep.subr.mxu0 0.0
    %338 = vmatpush1.msra.mxu0 0.0
    %339 = vmatprep.subr.mxu0 0.0
    %340 = vmatpush1.msra.mxu0 0.0
    %341 = vmatprep.subr.mxu0 0.0
    %342 = vmatpush1.msra.mxu0 0.0
    %343 = vmatprep.subr.mxu0 0.0
    %344 = vmatpush1.msra.mxu0 0.0
    %345 = vmatprep.subr.mxu0 0.0
    %346 = vmatpush1.msra.mxu0 0.0
    %347 = vmatprep.subr.mxu0 0.0
    %348 = vmatpush1.msra.mxu0 0.0
    %349 = vmatprep.subr.mxu0 0.0
    %350 = vmatpush1.msra.mxu0 0.0
    %351 = vmatprep.subr.mxu0 0.0
    %352 = vmatpush1.msra.mxu0 0.0
    %353 = vmatprep.subr.mxu0 0.0
    %354 = vmatpush1.msra.mxu0 0.0
    %355 = vmatprep.subr.mxu0 0.0
    %356 = vmatpush1.msra.mxu0 0.0
    %357 = vmatprep.subr.mxu0 0.0
    %358 = vmatpush1.msra.mxu0 0.0
    %359 = vmatprep.subr.mxu0 0.0
    %360 = vmatpush1.msra.mxu0 0.0
    %361 = vmatprep.subr.mxu0 0.0
    %362 = vmatpush1.msra.mxu0 0.0
    %363 = vmatprep.subr.mxu0 0.0
    %364 = vmatpush1.msra.mxu0 0.0
    %365 = vmatprep.subr.mxu0 0.0
    %366 = vmatpush1.msra.mxu0 0.0
    %367 = vmatprep.subr.mxu0 0.0
    %368 = vmatpush1.msra.mxu0 0.0
    %369 = vmatprep.subr.mxu0 0.0
    %370 = vmatpush1.msra.mxu0 0.0
    %371 = vmatprep.subr.mxu0 0.0
    %372 = vmatpush1.msra.mxu0 0.0
    %373 = vmatprep.subr.mxu0 0.0
    %374 = vmatpush1.msra.mxu0 0.0
    %375 = vmatprep.subr.mxu0 0.0
    %376 = vmatpush1.msra.mxu0 0.0
    %377 = vmatprep.subr.mxu0 0.0
    %378 = vmatpush1.msra.mxu0 0.0
    %379 = vmatprep.subr.mxu0 0.0
    %380 = vmatpush1.msra.mxu0 0.0
    %381 = vmatprep.subr.mxu0 0.0
    %382 = vmatpush1.msra.mxu0 0.0
    %383 = vmatprep.subr.mxu0 0.0
    %384 = vmatpush1.msra.mxu0 0.0
    %385 = vmatprep.subr.mxu0 0.0
    %386 = vmatpush1.msra.mxu0 0.0
    %387 = vmatprep.subr.mxu0 0.0
    %388 = vmatpush1.msra.mxu0 0.0
    %389 = vmatprep.mubr.f32.mxu0 0.0
    %390 = vmatmul.mubr.f32.gmra.mrb[0].mxu0 %v228
    %v391 = vpop.f32.mrb[0].mxu0
    %v392 = vadd.f32 0.0, %v391
    %v393 = vpop.f32.mrb[0].mxu0
    %v394 = vadd.f32 0.0, %v393
    %395 = vmatprep.mubr.f32.mxu0 0.0
    %396 = vmatmul.mubr.f32.gmra.mrb[0].mxu0 %v230
    %v397 = vpop.f32.mrb[0].mxu0
    %v398 = vadd.f32 0.0, %v397
    %v399 = vpop.f32.mrb[0].mxu0
    %v400 = vadd.f32 0.0, %v399
    %401 = vmatprep.mubr.f32.mxu0 0.0
    %402 = vmatmul.mubr.f32.gmra.mrb[0].mxu0 %v232
    %v403 = vpop.f32.mrb[0].mxu0
    %v404 = vadd.f32 0.0, %v403
    %v405 = vpop.f32.mrb[0].mxu0
    %v406 = vadd.f32 0.0, %v405
    %407 = vmatprep.mubr.f32.mxu0 0.0
    %408 = vmatmul.mubr.f32.gmra.mrb[0].mxu0 %v234
    %v409 = vpop.f32.mrb[0].mxu0
    %v410 = vadd.f32 0.0, %v409
    %v411 = vpop.f32.mrb[0].mxu0
    %v412 = vadd.f32 0.0, %v411
    %413 = vdwg.mxu0
    %414 = vmatprep.subr.mxu0 %v208
    %415 = vmatpush1.msra.mxu0 %v207
    %416 = vmatprep.subr.mxu0 %v214
    %417 = vmatpush1.msra.mxu0 %v213
    %418 = vmatprep.subr.mxu0 %v220
    %419 = vmatpush1.msra.mxu0 %v219
    %420 = vmatprep.subr.mxu0 %v226
    %421 = vmatpush1.msra.mxu0 %v225
    %422 = vmatprep.subr.mxu0 0.0
    %423 = vmatpush1.msra.mxu0 0.0
    %424 = vmatprep.subr.mxu0 0.0
    %425 = vmatpush1.msra.mxu0 0.0
    %426 = vmatprep.subr.mxu0 0.0
    %427 = vmatpush1.msra.mxu0 0.0
    %428 = vmatprep.subr.mxu0 0.0
    %429 = vmatpush1.msra.mxu0 0.0
    %430 = vmatprep.subr.mxu0 0.0
    %431 = vmatpush1.msra.mxu0 0.0
    %432 = vmatprep.subr.mxu0 0.0
    %433 = vmatpush1.msra.mxu0 0.0
    %434 = vmatprep.subr.mxu0 0.0
    %435 = vmatpush1.msra.mxu0 0.0
    %436 = vmatprep.subr.mxu0 0.0
    %437 = vmatpush1.msra.mxu0 0.0
    %438 = vmatprep.subr.mxu0 0.0
    %439 = vmatpush1.msra.mxu0 0.0
    %440 = vmatprep.subr.mxu0 0.0
    %441 = vmatpush1.msra.mxu0 0.0
    %442 = vmatprep.subr.mxu0 0.0
    %443 = vmatpush1.msra.mxu0 0.0
    %444 = vmatprep.subr.mxu0 0.0
    %445 = vmatpush1.msra.mxu0 0.0
    %446 = vmatprep.subr.mxu0 0.0
    %447 = vmatpush1.msra.mxu0 0.0
    %448 = vmatprep.subr.mxu0 0.0
    %449 = vmatpush1.msra.mxu0 0.0
    %450 = vmatprep.subr.mxu0 0.0
    %451 = vmatpush1.msra.mxu0 0.0
    %452 = vmatprep.subr.mxu0 0.0
    %453 = vmatpush1.msra.mxu0 0.0
    %454 = vmatprep.subr.mxu0 0.0
    %455 = vmatpush1.msra.mxu0 0.0
    %456 = vmatprep.subr.mxu0 0.0
    %457 = vmatpush1.msra.mxu0 0.0
    %458 = vmatprep.subr.mxu0 0.0
    %459 = vmatpush1.msra.mxu0 0.0
    %460 = vmatprep.subr.mxu0 0.0
    %461 = vmatpush1.msra.mxu0 0.0
    %462 = vmatprep.subr.mxu0 0.0
    %463 = vmatpush1.msra.mxu0 0.0
    %464 = vmatprep.subr.mxu0 0.0
    %465 = vmatpush1.msra.mxu0 0.0
    %466 = vmatprep.subr.mxu0 0.0
    %467 = vmatpush1.msra.mxu0 0.0
    %468 = vmatprep.subr.mxu0 0.0
    %469 = vmatpush1.msra.mxu0 0.0
    %470 = vmatprep.subr.mxu0 0.0
    %471 = vmatpush1.msra.mxu0 0.0
    %472 = vmatprep.subr.mxu0 0.0
    %473 = vmatpush1.msra.mxu0 0.0
    %474 = vmatprep.subr.mxu0 0.0
    %475 = vmatpush1.msra.mxu0 0.0
    %476 = vmatprep.subr.mxu0 0.0
    %477 = vmatpush1.msra.mxu0 0.0
    %478 = vmatprep.mubr.f32.mxu0 0.0
    %479 = vmatmul.mubr.f32.gmra.mrb[0].mxu0 %v228
    %v480 = vpop.f32.mrb[0].mxu0
    %v481 = vadd.f32 0.0, %v480
    %v482 = vpop.f32.mrb[0].mxu0
    %v483 = vadd.f32 0.0, %v482
    %484 = vmatprep.mubr.f32.mxu0 0.0
    %485 = vmatmul.mubr.f32.gmra.mrb[0].mxu0 %v230
    %v486 = vpop.f32.mrb[0].mxu0
    %v487 = vadd.f32 0.0, %v486
    %v488 = vpop.f32.mrb[0].mxu0
    %v489 = vadd.f32 0.0, %v488
    %490 = vmatprep.mubr.f32.mxu0 0.0
    %491 = vmatmul.mubr.f32.gmra.mrb[0].mxu0 %v232
    %v492 = vpop.f32.mrb[0].mxu0
    %v493 = vadd.f32 0.0, %v492
    %v494 = vpop.f32.mrb[0].mxu0
    %v495 = vadd.f32 0.0, %v494
    %496 = vmatprep.mubr.f32.mxu0 0.0
    %497 = vmatmul.mubr.f32.gmra.mrb[0].mxu0 %v234
    %v498 = vpop.f32.mrb[0].mxu0
    %v499 = vadd.f32 0.0, %v498
    %v500 = vpop.f32.mrb[0].mxu0
    %v501 = vadd.f32 0.0, %v500
    %502 = vdwg.mxu0
    %503 = vset.pattern.permute.xlu0 34
    %504 = vperm.xlu0 %503, %v39
    %v505 = vpop.permute.xlu0 %504
    %507 = vset.pattern.permute.xlu0 34
    %508 = vperm.xlu0 %507, %v40
    %v509 = vpop.permute.xlu0 %508
    %511 = vset.pattern.permute.xlu0 34
    %512 = vperm.xlu0 %511, %v41
    %v513 = vpop.permute.xlu0 %512
    %515 = vset.pattern.permute.xlu0 34
    %516 = vperm.xlu0 %515, %v42
    %v517 = vpop.permute.xlu0 %516
    %v519 = vadd.f32 %v303, %v505
    %v520 = vadd.f32 %v305, %v505
    %v521 = vadd.f32 %v309, %v509
    %v522 = vadd.f32 %v311, %v509
    %v523 = vadd.f32 %v315, %v513
    %v524 = vadd.f32 %v317, %v513
    %v525 = vadd.f32 %v321, %v517
    %v526 = vadd.f32 %v323, %v517
    %v527 = vtanh.pop %v519
    %v528 = vtanh.pop %v520
    %v529 = vtanh.pop %v521
    %v530 = vtanh.pop %v522
    %v531 = vtanh.pop %v523
    %v532 = vtanh.pop %v524
    %v533 = vtanh.pop %v525
    %v534 = vtanh.pop %v526
    %v535 = vmul.f32 %v527, %v527
    %v536 = vmul.f32 %v528, %v528
    %v537 = vmul.f32 %v529, %v529
    %v538 = vmul.f32 %v530, %v530
    %v539 = vmul.f32 %v531, %v531
    %v540 = vmul.f32 %v532, %v532
    %v541 = vmul.f32 %v533, %v533
    %v542 = vmul.f32 %v534, %v534
    %v543 = vsub.f32 1.0, %v535
    %v544 = vsub.f32 1.0, %v536
    %v545 = vsub.f32 1.0, %v537
    %v546 = vsub.f32 1.0, %v538
    %v547 = vsub.f32 1.0, %v539
    %v548 = vsub.f32 1.0, %v540
    %v549 = vsub.f32 1.0, %v541
    %v550 = vsub.f32 1.0, %v542
    %v551 = vmul.f32 %v527, 2.0
    %v552 = vmul.f32 %v528, 2.0
    %v553 = vmul.f32 %v529, 2.0
    %v554 = vmul.f32 %v530, 2.0
    %v555 = vmul.f32 %v531, 2.0
    %v556 = vmul.f32 %v532, 2.0
    %v557 = vmul.f32 %v533, 2.0
    %v558 = vmul.f32 %v534, 2.0
    %v559 = vmul.f32 %v551, %v392
    %v560 = vmul.f32 %v552, %v394
    %v561 = vmul.f32 %v553, %v398
    %v562 = vmul.f32 %v554, %v400
    %v563 = vmul.f32 %v555, %v404
    %v564 = vmul.f32 %v556, %v406
    %v565 = vmul.f32 %v557, %v410
    %v566 = vmul.f32 %v558, %v412
    %v567 = vmul.f32 %v559, %v392
    %v568 = vmul.f32 %v560, %v394
    %v569 = vmul.f32 %v561, %v398
    %v570 = vmul.f32 %v562, %v400
    %v571 = vmul.f32 %v563, %v404
    %v572 = vmul.f32 %v564, %v406
    %v573 = vmul.f32 %v565, %v410
    %v574 = vmul.f32 %v566, %v412
    %v575 = vsub.f32 %v481, %v567
    %v576 = vsub.f32 %v483, %v568
    %v577 = vsub.f32 %v487, %v569
    %v578 = vsub.f32 %v489, %v570
    %v579 = vsub.f32 %v493, %v571
    %v580 = vsub.f32 %v495, %v572
    %v581 = vsub.f32 %v499, %v573
    %v582 = vsub.f32 %v501, %v574
    %v583 = vmul.f32 %v543, %v575
    %v584 = vmul.f32 %v544, %v576
    %v585 = vmul.f32 %v545, %v577
    %v586 = vmul.f32 %v546, %v578
    %v587 = vmul.f32 %v547, %v579
    %v588 = vmul.f32 %v548, %v580
    %v589 = vmul.f32 %v549, %v581
    %v590 = vmul.f32 %v550, %v582
    %v591 = vlaneseq
    %v592 = vand.u32 %v591, 127
    %v593 = vadd.s32 %v592, 128
    %vm594 = vcmp.ge.s32.totalorder %v592, 128
    %vm595 = vcmp.ge.s32.totalorder %v593, 128
    %vm596 = vcmp.lt.s32.totalorder %v592, 130
    %vm597 = vcmp.lt.s32.totalorder %v593, 130
    %vm598 = vmand %vm594, %vm596
    %vm599 = vmand %vm595, %vm597
    %v600 = vsel %vm598, 1, 0
    %v601 = vsel %vm599, 1, 0
    %vm602 = vcmp.eq.s32.totalorder %v600, 1
    %vm603 = vcmp.eq.s32.totalorder %v601, 1
    %v604 = vsel %vm602, %v527, %v583
    %v605 = vsel %vm603, %v528, %v584
    %v606 = vsel %vm602, %v529, %v585
    %v607 = vsel %vm603, %v530, %v586
    %v608 = vsel %vm602, %v531, %v587
    %v609 = vsel %vm603, %v532, %v588
    %v610 = vsel %vm602, %v533, %v589
    %v611 = vsel %vm603, %v534, %v590
    %612 = vset.pattern.permute.xlu0 35
    %613 = vperm.xlu0 %612, %v39
    %v614 = vpop.permute.xlu0 %613
    %616 = vset.pattern.permute.xlu0 35
    %617 = vperm.xlu0 %616, %v40
    %v618 = vpop.permute.xlu0 %617
    %620 = vset.pattern.permute.xlu0 35
    %621 = vperm.xlu0 %620, %v41
    %v622 = vpop.permute.xlu0 %621
    %624 = vset.pattern.permute.xlu0 35
    %625 = vperm.xlu0 %624, %v42
    %v626 = vpop.permute.xlu0 %625
    %v628 = vmul.f32 %v614, %v604
    %v629 = vmul.f32 %v614, %v605
    %v630 = vmul.f32 %v618, %v606
    %v631 = vmul.f32 %v618, %v607
    %v632 = vmul.f32 %v622, %v608
    %v633 = vmul.f32 %v622, %v609
    %v634 = vmul.f32 %v626, %v610
    %v635 = vmul.f32 %v626, %v611
    %v636 = vadd.f32 %v628, %v630
    %v637 = vadd.f32 %v636, %v632
    %v638 = vadd.f32 %v637, %v634
    %v639 = vrot.slane %v638, 4
    %v640 = vadd.f32 %v638, %v639
    %v641 = vrot.slane %v640, 2
    %v642 = vadd.f32 %v640, %v641
    %v643 = vrot.slane %v642, 1
    %v644 = vadd.f32 %v642, %v643
    %v645 = vadd.f32 %v629, %v631
    %v646 = vadd.f32 %v645, %v633
    %v647 = vadd.f32 %v646, %v635
    %v648 = vrot.slane %v647, 4
    %v649 = vadd.f32 %v647, %v648
    %v650 = vrot.slane %v649, 2
    %v651 = vadd.f32 %v649, %v650
    %v652 = vrot.slane %v651, 1
    %v653 = vadd.f32 %v651, %v652
    %v654 = vsel %vm598, 20.0, 0.2
    %v655 = vsel %vm599, 20.0, 0.2
    %v656 = vmul.f32 %v644, %v654
    %v657 = vmul.f32 %v653, %v655
    %v658 = vmul.f32 %v43, 20.0
    %660 = vset.pattern.permute.xlu0 36
    %661 = vperm.xlu0 %660, %v658
    %v662 = vpop.permute.xlu0 %661
    %v664 = vsel %vm598, %v662, 0.0
    %v665 = vsel %vm599, %v662, 0.0
    %v666 = vadd.f32 %v656, %v664
    %v667 = vadd.f32 %v657, %v665
    %v670 = vcombine.low %v666, %v667
    %v672 = vunpack.c.l.s4 1966171168
    %v673 = vunpack.c.0.s8 %v672
    %v674 = vlaneseq
    %v675 = vshrl.u32 %v674, 7
    %v676 = vsub.s32 %v673, %v675
    %v677 = vrot.slane %v670, %v676
    %v679 = vunpack.c.l.s4 1966171168
    %v680 = vunpack.c.0.s8 %v679
    %v681 = vlaneseq
    %v682 = vshrl.u32 %v681, 7
    %v683 = vsub.s32 %v680, %v682
    %v684 = vrot.slane %v677, %v683
    %v686 = vlaneseq
    %vm687 = vcmp.ge.s32.totalorder %v686, 0
    %vm688 = vcmp.lt.s32.totalorder %v686, 256
    %vm689 = vmand %vm687, %vm688
    %690 = vst.msk [vmem:[#allocation8] sm:$0x3] %vm689, %v684
    // Predicated region
    $region18: #{tpu_custom_call.1} parent=1 // pred_check
      _
    $region19: #{tpu_custom_call.1} parent=1 // pred_check_branch
      %692 = sbr.rel (0) target = $region21
    $region20: #{tpu_custom_call.1} parent=1 // pred_region
      %s694 = ssub.s32 32, 32
      %695 = vsyncadd [#allocation5], %s694
      %s697 = sshll.u32 [#allocation8], 4
      %s698 = int_to_ptr.vmem [resolvable:$true] %s697
      %700 = dma.vmem_to_hbm [thread:$0]  %s698, 32, %s2, [#allocation5]
    $region21: #{tpu_custom_call.1} parent=1 // pred_fallthru
      _
    // Predicated region
    $region22: #{tpu_custom_call.1} parent=1 // pred_check
      _
    $region23: #{tpu_custom_call.1} parent=1 // pred_check_branch
      %702 = sbr.rel (0) target = $region25
    $region24: #{tpu_custom_call.1} parent=1 // pred_region
      %703 = dma.done [#allocation5], 32
    $region25: #{tpu_custom_call.1} parent=1 // pred_fallthru
      _
    %704 = vsyncpa [#allocation4], 1
    %705 = vsyncpa [#allocation7], 1
    %706 = vsyncpa [#allocation5], 1

</llo_original>
